<compile_context>
chip_gen: v5e
topology: v5e:2x2
jax: 0.10.0
libtpu: 0.0.40
codegen_flags: <defaults>
</compile_context>

<pallas_src>
import functools
import math

import jax
import jax.numpy as jnp
from jax import lax
from jax.experimental import pallas as pl
from jax.experimental.pallas import tpu as pltpu

BETA = 1e-6        # SVDORegularizer() default (assumed)
MAX_TK = 1024      # max K-reduction tile (lane axis) for bf16 A tiles


def _round_up(x, m):
    return -(-x // m) * m


def _vmem_limits():
    """Return (usable cap, scoped-default threshold) in bytes, generation-aware."""
    phys = 64 << 20                      # conservative default: v7x per-TC VMEM
    try:
        phys = int(pltpu.get_tpu_info().vmem_capacity_bytes)
    except Exception:                    # interpret mode / unexpected runtimes
        pass
    # Never request all of physical VMEM: leave headroom for Mosaic internal
    # scratch and the pipeline's own buffers (the v7x failure mode).
    cap = min(phys - (16 << 20), int(phys * 0.85))
    # v5e's default scoped VMEM is 16 MiB (v6e/v7x: 32 MiB). Raising the limit
    # when not strictly needed is harmless, so threshold on the smallest.
    scoped_default = 15 << 20
    return cap, scoped_default


def _vmem_est(s, tk, itemsize, nbuf_a=2):
    """Rough VMEM footprint, counting real (8,128)/lane padding of each block."""
    a_bytes = nbuf_a * _round_up(s, 16) * tk * itemsize       # A tile buffers
    x_bytes = 2 * 8 * _round_up(s, 128) * 4                   # (2,S) f32 block
    out_bytes = 2 * 8 * 128 * 4                               # (1,1,1) block pad
    ata_bytes = _round_up(s, 8) * _round_up(s, 128) * 4       # f32 accumulator
    epi_bytes = 6 * 8 * _round_up(s, 128) * 4                 # y/z temporaries
    return a_bytes + x_bytes + out_bytes + ata_bytes + epi_bytes + (1 << 20)


def _pick_tk(s, k_pad, itemsize, budget):
    """Largest multiple of 128 that divides k_pad, <= MAX_TK, and fits budget."""
    best = 128
    t = 128
    while t <= min(k_pad, MAX_TK):
        if k_pad % t == 0 and _vmem_est(s, t, itemsize) <= budget:
            best = t
        t += 128
    return best


def _a_blockspec(block_shape, index_map, nbuf):
    if nbuf > 2:
        try:
            return pl.BlockSpec(block_shape, index_map,
                                pipeline_mode=pl.Buffered(nbuf))
        except Exception:          # pipeline_mode / Buffered not available
            pass
    return pl.BlockSpec(block_shape, index_map)


def _epilogue(ata, x, out_ref, beta):
    """SVDO power-iteration epilogue on a resident (S,S) f32 Gram matrix.

    x: (2, S) f32, rows = [x1, x2], lane-dense. ATA is symmetric so
    ATA @ v == (v @ ATA) for row vectors; everything stays row-major.
    """
    y = jnp.dot(x, ata, preferred_element_type=jnp.float32)   # [ATA x1; ATA x2]
    z = jnp.dot(y, ata, preferred_element_type=jnp.float32)   # [ATA^2 x1; ...]
    x2 = x[1:2, :]
    y1, y2 = y[0:1, :], y[1:2, :]
    z1, z2 = z[0:1, :], z[1:2, :]

    largest = (jnp.sum(z1 * y1, keepdims=True)
               / jnp.sum(y1 * y1, keepdims=True))              # (1, 1)

    # (ATA - l*I) applied twice to x2 without another full ATA pass:
    #   ax2  = y2 - l*x2
    #   aax2 = ATA@ax2 - l*ax2 = z2 - 2*l*y2 + l^2*x2
    ax2 = y2 - largest * x2
    aax2 = z2 - 2.0 * largest * y2 + (largest * largest) * x2
    tmp = (jnp.sum(aax2 * ax2, keepdims=True)
           / jnp.sum(ax2 * ax2, keepdims=True))                # (1, 1)

    largest_sv = tmp + largest      # torch reference naming quirk preserved
    smallest_sv = largest
    out_ref[...] = (beta * 10.0 * (largest_sv - smallest_sv) ** 2
                    ).reshape(1, 1, 1)


def svdo_single_tile_kernel(a_ref, x_ref, out_ref, *, beta):
    """nk == 1: whole A fits in one tile; no scratch round-trip."""
    a = a_ref[0]                                               # (S, K_pad)
    ata = lax.dot_general(a, a, (((1,), (1,)), ((), ())),
                          preferred_element_type=jnp.float32)
    _epilogue(ata, x_ref[0], out_ref, beta)


def svdo_multi_tile_kernel(a_ref, x_ref, out_ref, ata_ref, *, beta):
    """nk > 1: accumulate the Gram in a resident (S,S) f32 VMEM scratch."""
    k = pl.program_id(1)

    @pl.when(k == 0)
    def _():
        ata_ref[...] = jnp.zeros_like(ata_ref)

    a = a_ref[0]                                               # (S, TK) bf16
    ata_ref[...] += lax.dot_general(a, a, (((1,), (1,)), ((), ())),
                                    preferred_element_type=jnp.float32)

    @pl.when(k == pl.num_programs(1) - 1)
    def _():
        _epilogue(ata_ref[...], x_ref[0], out_ref, beta)


def _svdo_group_pallas(a_list, x_list, beta=BETA, a_dtype=jnp.bfloat16):
    """a_list: list of (S, K_i) weight views (same S); x_list: list of (S, 2).

    Returns (G,) f32 per-layer penalties. a_dtype=jnp.float32 disables the
    bf16 MXU fast path if exact f32 Gram parity is required.
    """
    s = int(a_list[0].shape[0])
    g = len(a_list)
    itemsize = jnp.dtype(a_dtype).itemsize
    k_max = max(int(a.shape[1]) for a in a_list)
    k_pad = _round_up(k_max, 128)

    cap, scoped_default = _vmem_limits()
    tk = _pick_tk(s, k_pad, itemsize, cap)
    nk = k_pad // tk

    # Host-side: cast once (bf16 halves DMA bytes + A-tile VMEM) and zero-pad K
    # so the kernel never needs a ragged-lane mask.
    a_stack = jnp.stack([
        jnp.pad(a.astype(a_dtype), ((0, 0), (0, k_pad - int(a.shape[1]))))
        for a in a_list])                                      # (G, S, K_pad)
    # Lane-dense random vectors: (G, 2, S).
    x_stack = jnp.stack([x.astype(jnp.float32).T for x in x_list])

    cost = pl.CostEstimate(
        flops=2 * g * s * s * k_pad + 8 * g * s * s,
        transcendentals=0,
        bytes_accessed=g * s * k_pad * itemsize + g * 2 * s * 4 + g * 4)

    if nk == 1:
        kern = functools.partial(svdo_single_tile_kernel, beta=beta)
        grid = (g,)
        nbuf_a = 3 if s <= 256 else 2       # tiny per-step compute: keep DMA fed
        in_specs = [_a_blockspec((1, s, k_pad), lambda gi: (gi, 0, 0), nbuf_a),
                    pl.BlockSpec((1, 2, s), lambda gi: (gi, 0, 0))]
        out_specs = pl.BlockSpec((1, 1, 1), lambda gi: (gi, 0, 0))
        scratch = []
        dims = ("parallel",)
    else:
        kern = functools.partial(svdo_multi_tile_kernel, beta=beta)
        grid = (g, nk)
        nbuf_a = 2
        in_specs = [pl.BlockSpec((1, s, tk), lambda gi, ki: (gi, 0, ki)),
                    pl.BlockSpec((1, 2, s), lambda gi, ki: (gi, 0, 0))]
        out_specs = pl.BlockSpec((1, 1, 1), lambda gi, ki: (gi, 0, 0))
        scratch = [pltpu.VMEM((s, s), jnp.float32)]
        # TODO(synk): on v7x consider pltpu.CORE_PARALLEL on the G axis so the
        #             second TensorCore is guaranteed to pick up groups.
        dims = ("parallel", "arbitrary")

    cp_kwargs = dict(dimension_semantics=dims)
    est = _vmem_est(s, tk, itemsize, nbuf_a)
    if est > scoped_default:
        # TODO(synk): for S >= ~4096 the (S,S) f32 accumulator alone exceeds the
        #             v7x cap; tile ATA along output columns in that regime.
        cp_kwargs["vmem_limit_bytes"] = int(min(est + (4 << 20), cap))

    out = pl.pallas_call(
        kern,
        out_shape=jax.ShapeDtypeStruct((g, 1, 1), jnp.float32),
        grid_spec=pltpu.PrefetchScalarGridSpec(
            num_scalar_prefetch=0,
            grid=grid,
            in_specs=in_specs,
            out_specs=out_specs,
            scratch_shapes=scratch,
        ),
        compiler_params=pltpu.CompilerParams(**cp_kwargs),
        cost_estimate=cost,
    )(a_stack, x_stack)
    return out[:, 0, 0]


def conv_regularizer(conv_weights, rand_vecs, ignore=False, beta=BETA):
    """ConvRegularizer.forward: sum SVDO penalty over all conv weights.

    conv_weights: list of torch-OIHW weights (S, C, H, Wd).
    rand_vecs:    list of (S, 2) random vectors (stand-ins for torch.rand).
    """
    if ignore:
        return jnp.zeros((), jnp.float32)

    # Group by S only; different K within a group is bucketed by zero-padding,
    # so many layers share one batched pallas_call (fewer, fatter launches).
    groups = {}
    for w, x in zip(conv_weights, rand_vecs):
        s = int(w.shape[0])
        if s == 1:
            # Single-output-channel conv: reference SVDO returns 0.
            continue
        k = math.prod(w.shape[1:])
        a = jnp.asarray(w).reshape(s, k)
        groups.setdefault(s, []).append((a, jnp.asarray(x)))

    total = jnp.zeros((), jnp.float32)
    for s, items in groups.items():
        a_list = [a for a, _ in items]
        x_list = [x for _, x in items]
        partials = _svdo_group_pallas(a_list, x_list, beta)
        total = total + jnp.sum(partials)
    return total


def _svdo_ref(w, x, beta=BETA):
    """Pure-JAX reference (bf16 A like the kernel, f32 elsewhere)."""
    s = int(w.shape[0])
    if s == 1:
        return jnp.zeros((), jnp.float32)
    a = w.reshape(s, -1).astype(jnp.bfloat16).astype(jnp.float32)
    ata = a @ a.T
    x1 = x[:, 0:1].astype(jnp.float32)
    x2 = x[:, 1:2].astype(jnp.float32)

    def rayleigh(m, v):
        mv = m @ v
        mmv = m @ mv
        return (mmv.T @ mv) / (mv.T @ mv)

    l = rayleigh(ata, x1)[0, 0]
    t = rayleigh(ata - l * jnp.eye(s, dtype=jnp.float32), x2)[0, 0]
    return beta * 10.0 * ((t + l) - l) ** 2


if __name__ == "__main__":
    key = jax.random.PRNGKey(0)
    keys = jax.random.split(key, 10)

    # Synthetic "net": Conv2d weights in torch OIHW layout.
    # w2/w3/w4 share S=16 (fused batched launch, mixed K bucketed by padding);
    # w5 has K=1152 > 1024 to exercise the multi-tile (nk>1) Gram accumulation.
    w1 = jax.random.normal(keys[0], (8, 4, 3, 3), jnp.float32) * 0.1
    w2 = jax.random.normal(keys[1], (16, 8, 3, 3), jnp.float32) * 0.1
    w3 = jax.random.normal(keys[2], (16, 8, 3, 3), jnp.float32) * 0.1
    w4 = jax.random.normal(keys[3], (16, 4, 5, 5), jnp.float32) * 0.1
    w5 = jax.random.normal(keys[4], (8, 128, 3, 3), jnp.float32) * 0.1

    # Deterministic stand-ins for the torch.rand(N, 1) draws (two per weight).
    x1 = jax.random.uniform(keys[5], (8, 2), jnp.float32)
    x2 = jax.random.uniform(keys[6], (16, 2), jnp.float32)
    x3 = jax.random.uniform(keys[7], (16, 2), jnp.float32)
    x4 = jax.random.uniform(keys[8], (16, 2), jnp.float32)
    x5 = jax.random.uniform(keys[9], (8, 2), jnp.float32)

    weights = [w1, w2, w3, w4, w5]
    rands = [x1, x2, x3, x4, x5]

    out = jax.block_until_ready(conv_regularizer(weights, rands, ignore=False))
    out_ignored = jax.block_until_ready(
        conv_regularizer(weights, rands, ignore=True))

    ref = jnp.sum(jnp.stack([_svdo_ref(w, x) for w, x in zip(weights, rands)]))
    ref = float(jax.block_until_ready(ref))

    assert out.shape == () and out.dtype == jnp.float32
    assert bool(jnp.isfinite(out))
    assert float(out_ignored) == 0.0
    assert abs(float(out) - ref) <= 0.05 * abs(ref) + 1e-12, (float(out), ref)
    print("KERNEL_OK")
</pallas_src>

<mosaic_0001>
module attributes {stable_mosaic.version = 11 : i64} {
  func.func @svdo_multi_tile_kernel(%arg0: i32, %arg1: i32, %arg2: memref<1x8x384xbf16, #tpu.memory_space<vmem>>, %arg3: memref<1x2x8xf32, #tpu.memory_space<vmem>>, %arg4: memref<1x1x1xf32, #tpu.memory_space<vmem>>, %arg5: memref<8x8xf32, #tpu.memory_space<vmem>>) attributes {dimension_semantics = [#tpu.dimension_semantics<parallel>, #tpu.dimension_semantics<arbitrary>], iteration_bounds = array<i64: 2, 3>, scalar_prefetch = 0 : i64, scratch_operands = 1 : i64, tpu.core_type = #tpu.core_type<tc>, window_params = [{transform_indices = @transform_0, window_bounds = array<i64: 1, 8, 384>}, {transform_indices = @transform_1, window_bounds = array<i64: 1, 2, 8>}, {transform_indices = @transform_2, window_bounds = array<i64: 1, 1, 1>}]} {
    %c0_i32 = arith.constant 0 : i32
    %0 = arith.cmpi eq, %arg1, %c0_i32 : i32
    %1 = arith.extui %0 : i1 to i32
    %c0_i32_0 = arith.constant 0 : i32
    %2 = arith.cmpi ne, %1, %c0_i32_0 : i32
    scf.if %2 {
      %cst_8 = arith.constant 0.000000e+00 : f32
      %12 = vector.broadcast %cst_8 : f32 to vector<8x8xf32>
      %c0_9 = arith.constant 0 : index
      %c0_10 = arith.constant 0 : index
      %13 = vector.load %arg5[%c0_9, %c0_10] : memref<8x8xf32, #tpu.memory_space<vmem>>, vector<8x8xf32>
      tpu.vector_store %arg5[%c0_9, %c0_10], %12 {strides = array<i32>} : memref<8x8xf32, #tpu.memory_space<vmem>>, vector<8x8xf32>,
    } else {
    }
    %c0 = arith.constant 0 : index
    %c0_1 = arith.constant 0 : index
    %c0_2 = arith.constant 0 : index
    %3 = vector.load %arg2[%c0, %c0_1, %c0_2] : memref<1x8x384xbf16, #tpu.memory_space<vmem>>, vector<1x8x384xbf16>
    %4 = vector.shape_cast %3 : vector<1x8x384xbf16> to vector<8x384xbf16>
    %c0_3 = arith.constant 0 : index
    %c0_4 = arith.constant 0 : index
    %5 = vector.load %arg5[%c0_3, %c0_4] : memref<8x8xf32, #tpu.memory_space<vmem>>, vector<8x8xf32>
    %cst = arith.constant dense<0.000000e+00> : vector<8x8xf32>
    %6 = tpu.matmul %4, %4, %cst {dimension_numbers = #tpu.dot_dimension_numbers<[1], [1], [0], [0], [0, 0, 1, 0], [], []>} : vector<8x384xbf16>, vector<8x384xbf16>, vector<8x8xf32> -> vector<8x8xf32>
    %7 = arith.addf %5, %6 : vector<8x8xf32>
    %c0_5 = arith.constant 0 : index
    %c0_6 = arith.constant 0 : index
    %8 = vector.load %arg5[%c0_5, %c0_6] : memref<8x8xf32, #tpu.memory_space<vmem>>, vector<8x8xf32>
    tpu.vector_store %arg5[%c0_5, %c0_6], %7 {strides = array<i32>} : memref<8x8xf32, #tpu.memory_space<vmem>>, vector<8x8xf32>,
    %c2_i32 = arith.constant 2 : i32
    %9 = arith.cmpi eq, %arg1, %c2_i32 : i32
    %10 = arith.extui %9 : i1 to i32
    %c0_i32_7 = arith.constant 0 : i32
    %11 = arith.cmpi ne, %10, %c0_i32_7 : i32
    scf.if %11 {
      %c0_8 = arith.constant 0 : index
      %c0_9 = arith.constant 0 : index
      %12 = vector.load %arg5[%c0_8, %c0_9] : memref<8x8xf32, #tpu.memory_space<vmem>>, vector<8x8xf32>
      %c0_10 = arith.constant 0 : index
      %c0_11 = arith.constant 0 : index
      %c0_12 = arith.constant 0 : index
      %13 = vector.load %arg3[%c0_10, %c0_11, %c0_12] : memref<1x2x8xf32, #tpu.memory_space<vmem>>, vector<1x2x8xf32>
      %14 = vector.shape_cast %13 : vector<1x2x8xf32> to vector<2x8xf32>
      %cst_13 = arith.constant dense<0.000000e+00> : vector<2x8xf32>
      %15 = tpu.matmul %14, %12, %cst_13 {dimension_numbers = #tpu.dot_dimension_numbers<[1], [0], [0], [1], [0, 0, 1, 1], [], []>} : vector<2x8xf32>, vector<8x8xf32>, vector<2x8xf32> -> vector<2x8xf32>
      %cst_14 = arith.constant dense<0.000000e+00> : vector<2x8xf32>
      %16 = tpu.matmul %15, %12, %cst_14 {dimension_numbers = #tpu.dot_dimension_numbers<[1], [0], [0], [1], [0, 0, 1, 1], [], []>} : vector<2x8xf32>, vector<8x8xf32>, vector<2x8xf32> -> vector<2x8xf32>
      %17 = vector.extract_strided_slice %14 {offsets = [1, 0], sizes = [1, 8], strides = [1, 1]} : vector<2x8xf32> to vector<1x8xf32>
      %18 = vector.extract_strided_slice %15 {offsets = [0, 0], sizes = [1, 8], strides = [1, 1]} : vector<2x8xf32> to vector<1x8xf32>
      %19 = vector.extract_strided_slice %15 {offsets = [1, 0], sizes = [1, 8], strides = [1, 1]} : vector<2x8xf32> to vector<1x8xf32>
      %20 = vector.extract_strided_slice %16 {offsets = [0, 0], sizes = [1, 8], strides = [1, 1]} : vector<2x8xf32> to vector<1x8xf32>
      %21 = vector.extract_strided_slice %16 {offsets = [1, 0], sizes = [1, 8], strides = [1, 1]} : vector<2x8xf32> to vector<1x8xf32>
      %22 = arith.mulf %20, %18 : vector<1x8xf32>
      %23 = vector.shape_cast %22 : vector<1x8xf32> to vector<1x1x8xf32>
      %cst_15 = arith.constant dense<0.000000e+00> : vector<1xf32>
      %24 = vector.multi_reduction <add>, %23, %cst_15 [1, 2] : vector<1x1x8xf32> to vector<1xf32>
      %25 = vector.shape_cast %24 : vector<1xf32> to vector<1x1x1xf32>
      %26 = vector.extract %25[0, 0, 0] : f32 from vector<1x1x1xf32>
      %27 = vector.broadcast %26 : f32 to vector<1x1xf32>
      %28 = arith.mulf %18, %18 : vector<1x8xf32>
      %29 = vector.shape_cast %28 : vector<1x8xf32> to vector<1x1x8xf32>
      %cst_16 = arith.constant dense<0.000000e+00> : vector<1xf32>
      %30 = vector.multi_reduction <add>, %29, %cst_16 [1, 2] : vector<1x1x8xf32> to vector<1xf32>
      %31 = vector.shape_cast %30 : vector<1xf32> to vector<1x1x1xf32>
      %32 = vector.extract %31[0, 0, 0] : f32 from vector<1x1x1xf32>
      %33 = vector.broadcast %32 : f32 to vector<1x1xf32>
      %34 = arith.divf %27, %33 : vector<1x1xf32>
      %35 = vector.broadcast %34 : vector<1x1xf32> to vector<1x8xf32>
      %36 = arith.mulf %35, %17 : vector<1x8xf32>
      %37 = arith.subf %19, %36 : vector<1x8xf32>
      %cst_17 = arith.constant 2.000000e+00 : f32
      %38 = vector.broadcast %cst_17 : f32 to vector<1x1xf32>
      %39 = arith.mulf %38, %34 : vector<1x1xf32>
      %40 = vector.broadcast %39 : vector<1x1xf32> to vector<1x8xf32>
      %41 = arith.mulf %40, %19 : vector<1x8xf32>
      %42 = arith.subf %21, %41 : vector<1x8xf32>
      %43 = arith.mulf %34, %34 : vector<1x1xf32>
      %44 = vector.broadcast %43 : vector<1x1xf32> to vector<1x8xf32>
      %45 = arith.mulf %44, %17 : vector<1x8xf32>
      %46 = arith.addf %42, %45 : vector<1x8xf32>
      %47 = arith.mulf %46, %37 : vector<1x8xf32>
      %48 = vector.shape_cast %47 : vector<1x8xf32> to vector<1x1x8xf32>
      %cst_18 = arith.constant dense<0.000000e+00> : vector<1xf32>
      %49 = vector.multi_reduction <add>, %48, %cst_18 [1, 2] : vector<1x1x8xf32> to vector<1xf32>
      %50 = vector.shape_cast %49 : vector<1xf32> to vector<1x1x1xf32>
      %51 = vector.extract %50[0, 0, 0] : f32 from vector<1x1x1xf32>
      %52 = vector.broadcast %51 : f32 to vector<1x1xf32>
      %53 = arith.mulf %37, %37 : vector<1x8xf32>
      %54 = vector.shape_cast %53 : vector<1x8xf32> to vector<1x1x8xf32>
      %cst_19 = arith.constant dense<0.000000e+00> : vector<1xf32>
      %55 = vector.multi_reduction <add>, %54, %cst_19 [1, 2] : vector<1x1x8xf32> to vector<1xf32>
      %56 = vector.shape_cast %55 : vector<1xf32> to vector<1x1x1xf32>
      %57 = vector.extract %56[0, 0, 0] : f32 from vector<1x1x1xf32>
      %58 = vector.broadcast %57 : f32 to vector<1x1xf32>
      %59 = arith.divf %52, %58 : vector<1x1xf32>
      %60 = arith.addf %59, %34 : vector<1x1xf32>
      %61 = arith.subf %60, %34 : vector<1x1xf32>
      %62 = arith.mulf %61, %61 : vector<1x1xf32>
      %cst_20 = arith.constant 9.99999974E-6 : f32
      %63 = vector.broadcast %cst_20 : f32 to vector<1x1xf32>
      %64 = arith.mulf %63, %62 : vector<1x1xf32>
      %65 = vector.shape_cast %64 : vector<1x1xf32> to vector<1x1x1xf32>
      %c0_21 = arith.constant 0 : index
      %c0_22 = arith.constant 0 : index
      %c0_23 = arith.constant 0 : index
      %66 = vector.load %arg4[%c0_21, %c0_22, %c0_23] : memref<1x1x1xf32, #tpu.memory_space<vmem>>, vector<1x1x1xf32>
      tpu.vector_store %arg4[%c0_21, %c0_22, %c0_23], %65 {strides = array<i32>} : memref<1x1x1xf32, #tpu.memory_space<vmem>>, vector<1x1x1xf32>,
    } else {
    }
    return
  }
  func.func @transform_0(%arg0: i32, %arg1: i32) -> (i32, i32, i32) {
    %c0_i32 = arith.constant 0 : i32
    %c0_i32_0 = arith.constant 0 : i32
    return %arg0, %c0_i32, %arg1 : i32, i32, i32
  }
  func.func @transform_1(%arg0: i32, %arg1: i32) -> (i32, i32, i32) {
    %c0_i32 = arith.constant 0 : i32
    %c0_i32_0 = arith.constant 0 : i32
    %c0_i32_1 = arith.constant 0 : i32
    return %arg0, %c0_i32, %c0_i32_0 : i32, i32, i32
  }
  func.func @transform_2(%arg0: i32, %arg1: i32) -> (i32, i32, i32) {
    %c0_i32 = arith.constant 0 : i32
    %c0_i32_0 = arith.constant 0 : i32
    %c0_i32_1 = arith.constant 0 : i32
    return %arg0, %c0_i32, %c0_i32_0 : i32, i32, i32
  }
}

</mosaic_0001>

<llo_original>
// kernel: tpu_custom_call.1
$region0: #{tpu_custom_call.1}
  #allocation0 [shape = 'u32[]', space=smem, size = 0x4, offset = 0x4, fixed_abs, tag = 'smem constant byte address 0x4 - core index']
  #allocation1 [shape = 'u32[72,128]{1,0:T(1,128)}', space=vmem, size = 0x9000, scoped, tag = 'internal scratch']
  #allocation2 [shape = 'f32[8,8]{1,0:T(8,128)}', space=vmem, size = 0x1000, scoped, tag = 'scratch operand']
  %s0 = inlined_call_operand.hbm [shape: bf16[2,8,1152], index: 0, kind: input, shape index: {}]
  %s1 = inlined_call_operand.hbm [shape: f32[2,2,8], index: 1, kind: input, shape index: {}]
  %s2 = inlined_call_operand.vmem [shape: f32[2,1,1], index: 2, kind: output, shape index: {}]
  %s3 = sld [smem:[#allocation0]]
  $region57: #{tpu_custom_call.1} parent=0
    _
  %s5 = ssub.s32 1, %s3
  %s6 = scalar_select 0, %s5, %s3
  $region1: #{tpu_custom_call.1} parent=0
    #allocation3 [shape = 'u8[12288]{0}', space=vmem, size = 0x3000, scoped, tag = 'input window, operand 0']
    #allocation4 [shape = 's32[2]{0}', space=sflag, size = 0x8, scoped, tag = 'scoped memory for tpu_custom_call.1']
    #allocation5 [shape = 'u8[2048]{0}', space=vmem, size = 0x800, scoped, tag = 'input window, operand 1']
    #allocation6 [shape = 's32[2]{0}', space=sflag, size = 0x8, scoped, tag = 'scoped memory for tpu_custom_call.1']
    %7 = vsyncpa [#allocation4], 0
    %s8 = scalar_lea.sflag [#allocation4], 1
    %9 = vsyncpa %s8, 0
    %10 = vsyncpa [#allocation6], 0
    %s11 = scalar_lea.sflag [#allocation6], 1
    %12 = vsyncpa %s11, 0
    loop: start=0, step=1, limit=8
    $region2: #{tpu_custom_call.1} parent=1 // loop_pre_header
      _
    $region3: #{tpu_custom_call.1} parent=1 // loop_header
      %s14 = sphi 0, %s18
      %p15 = scmp.ge.s32.totalorder %s14, 8
      %s21 = sphi 0, %s33
      %s22 = sphi 0, %s29
      %s23 = sphi 0, %s21
      %s24 = sphi 0, %s22
      %s25 = sphi 0, %s23
      %s26 = sphi 0, %s24
      %s38 = sphi 0, %s40
      %s41 = sphi 0, %s38
      %s42 = sphi 0, %s41
      %s58 = sphi 0, %s42
      %s64 = sphi 0, %s66
      %s67 = sphi 0, %s64
      %s68 = sphi 0, %s67
      %s84 = sphi 0, %s68
      %s90 = sphi 0, %s92
      %s93 = sphi 0, %s90
      %s94 = sphi 0, %s93
      %s110 = sphi 0, %s94
    $region4: #{tpu_custom_call.1} parent=1 // loop_header_branch
      %17 = sbr.rel (%p15) target = $region8
    $region5: #{tpu_custom_call.1} parent=1 // loop_body
      %s19 = ssub.s32 %s14, 1
      %s20 = ssub.s32 %s14, 2
      %s27 = sadd.s32 1, %s22
      %p28 = scmp.ge.s32.totalorder %s27, 3
      %s29 = scalar_select %p28, 0, %s27
      %s30 = sadd.s32 1, %s21
      %s31 = scalar_select %p28, %s30, %s21
      %p32 = scmp.ge.s32.totalorder %s31, 2
      %s33 = scalar_select %p32, 0, %s31
      %s34 = ssub.s32 %s21, %s33
      %s35 = ssub.s32 %s22, %s29
      %s36 = sor.u32 %s34, %s35
      %p37 = scmp.eq.s32.totalorder %s36, 0
      %s39 = sadd.s32 %s38, 1
      %s40 = scalar_select %p37, %s38, %s39
      %p43 = pneg %p37
      %p44 = scmp.eq.s32.totalorder %s14, 5
      %p45 = por %p43, %p44
      %p46 = scmp.ne.s32.totalorder %s38, %s41
      %p47 = scmp.eq.s32.totalorder %s14, 0
      %p48 = por %p46, %p47
      %p49 = scmp.ne.s32.totalorder %s38, %s41
      %p50 = scmp.eq.s32.totalorder %s19, 5
      %p51 = por %p49, %p50
      %p52 = scmp.ne.s32.totalorder %s41, %s42
      %p53 = scmp.eq.s32.totalorder %s19, 0
      %p54 = por %p52, %p53
      %p55 = scmp.ne.s32.totalorder %s41, %s42
      %p56 = scmp.eq.s32.totalorder %s20, 5
      %p57 = por %p55, %p56
      %p59 = scmp.ne.s32.totalorder %s42, %s58
      %p60 = scmp.eq.s32.totalorder %s20, 0
      %p61 = por %p59, %p60
      %s62 = ssub.s32 %s21, %s33
      %p63 = scmp.eq.s32.totalorder %s62, 0
      %s65 = sadd.s32 %s64, 1
      %s66 = scalar_select %p63, %s64, %s65
      %p69 = pneg %p63
      %p70 = scmp.eq.s32.totalorder %s14, 5
      %p71 = por %p69, %p70
      %p72 = scmp.ne.s32.totalorder %s64, %s67
      %p73 = scmp.eq.s32.totalorder %s14, 0
      %p74 = por %p72, %p73
      %p75 = scmp.ne.s32.totalorder %s64, %s67
      %p76 = scmp.eq.s32.totalorder %s19, 5
      %p77 = por %p75, %p76
      %p78 = scmp.ne.s32.totalorder %s67, %s68
      %p79 = scmp.eq.s32.totalorder %s19, 0
      %p80 = por %p78, %p79
      %p81 = scmp.ne.s32.totalorder %s67, %s68
      %p82 = scmp.eq.s32.totalorder %s20, 5
      %p83 = por %p81, %p82
      %p85 = scmp.ne.s32.totalorder %s68, %s84
      %p86 = scmp.eq.s32.totalorder %s20, 0
      %p87 = por %p85, %p86
      %s88 = ssub.s32 %s21, %s33
      %p89 = scmp.eq.s32.totalorder %s88, 0
      %s91 = sadd.s32 %s90, 1
      %s92 = scalar_select %p89, %s90, %s91
      %p95 = pneg %p89
      %p96 = scmp.eq.s32.totalorder %s14, 5
      %p97 = por %p95, %p96
      %p98 = scmp.ne.s32.totalorder %s90, %s93
      %p99 = scmp.eq.s32.totalorder %s14, 0
      %p100 = por %p98, %p99
      %p101 = scmp.ne.s32.totalorder %s90, %s93
      %p102 = scmp.eq.s32.totalorder %s19, 5
      %p103 = por %p101, %p102
      %p104 = scmp.ne.s32.totalorder %s93, %s94
      %p105 = scmp.eq.s32.totalorder %s19, 0
      %p106 = por %p104, %p105
      %p107 = scmp.ne.s32.totalorder %s93, %s94
      %p108 = scmp.eq.s32.totalorder %s20, 5
      %p109 = por %p107, %p108
      %p111 = scmp.ne.s32.totalorder %s94, %s110
      %p112 = scmp.eq.s32.totalorder %s20, 0
      %p113 = por %p111, %p112
      %p114 = scmp.le.s32.totalorder 1, %s14
      %p115 = scmp.lt.s32.totalorder %s14, 7
      %p116 = pnand %p114, %p115
      %p117 = pneg %p116
      // Predicated region
      $region9: #{tpu_custom_call.1} parent=5 // pred_check
        _
      $region10: #{tpu_custom_call.1} parent=5 // pred_check_branch
        %119 = sbr.rel (%p116) target = $region12
      $region11: #{tpu_custom_call.1} parent=5 // pred_region
        %s120 = ssub.s32 %s14, 1
      $region12: #{tpu_custom_call.1} parent=5 // pred_fallthru
        _
      %p121 = scmp.lt.s32.totalorder %s14, 6
      // Predicated region
      $region13: #{tpu_custom_call.1} parent=5 // pred_check
        %p122 = pneg %p121
      $region14: #{tpu_custom_call.1} parent=5 // pred_check_branch
        %124 = sbr.rel (%p122) target = $region16
      $region15: #{tpu_custom_call.1} parent=5 // pred_region
        // Predicated region
        $region17: #{tpu_custom_call.1} parent=15 // pred_check
          %p125 = pneg %p48
        $region18: #{tpu_custom_call.1} parent=15 // pred_check_branch
          %127 = sbr.rel (%p125) target = $region20
        $region19: #{tpu_custom_call.1} parent=15 // pred_region
          %s128 = sand.u32 %s38, 1
          %s129 = scalar_lea.sflag [#allocation4], %s128
          %s130 = sand.u32 %s38, 1
          %s131 = smul.addr %s130, 12
          %s132 = scalar_lea.vmem [#allocation3], %s131
          %s133 = smul.u32 3, %s22
          %135 = vsyncadd %s129, 0
          %s136 = smul.addr %s21, 9
          %s137 = sadd.s32 %s133, %s136
          %s138 = smul.addr %s137, 4
          %s139 = scalar_lea.hbm %s0, %s138
          %s141 = sshll.u32 %s139, 4
          %s142 = int_to_ptr.hbm [resolvable:$true] %s141
          %s143 = sshll.u32 %s132, 4
          %s144 = int_to_ptr.vmem [resolvable:$true] %s143
          %146 = dma.hbm_to_vmem [thread:$0]  %s142, 192, %s144, %s129
        $region20: #{tpu_custom_call.1} parent=15 // pred_fallthru
          _
        // Predicated region
        $region21: #{tpu_custom_call.1} parent=15 // pred_check
          %p147 = pneg %p74
        $region22: #{tpu_custom_call.1} parent=15 // pred_check_branch
          %149 = sbr.rel (%p147) target = $region24
        $region23: #{tpu_custom_call.1} parent=15 // pred_region
          %s150 = sand.u32 %s64, 1
          %s151 = scalar_lea.sflag [#allocation6], %s150
          %s152 = sand.u32 %s64, 1
          %s153 = smul.addr %s152, 2
          %s154 = scalar_lea.vmem [#allocation5], %s153
          %156 = vsyncadd %s151, 0
          %s157 = smul.addr %s21, 2
          %s158 = scalar_lea.hbm %s1, %s157
          %s160 = sshll.u32 %s158, 4
          %s161 = int_to_ptr.hbm [resolvable:$true] %s160
          %s162 = sshll.u32 %s154, 4
          %s163 = int_to_ptr.vmem [resolvable:$true] %s162
          %165 = dma.hbm_to_vmem [thread:$0]  %s161, 32, %s163, %s151
        $region24: #{tpu_custom_call.1} parent=15 // pred_fallthru
          _
      $region16: #{tpu_custom_call.1} parent=5 // pred_fallthru
        _
      %p166 = scmp.le.s32.totalorder 1, %s14
      %p167 = scmp.lt.s32.totalorder %s14, 7
      %p168 = pnand %p166, %p167
      %p169 = pneg %p168
      // Predicated region
      $region25: #{tpu_custom_call.1} parent=5 // pred_check
        _
      $region26: #{tpu_custom_call.1} parent=5 // pred_check_branch
        %171 = sbr.rel (%p168) target = $region28
      $region27: #{tpu_custom_call.1} parent=5 // pred_region
        %s172 = ssub.s32 %s14, 1
        %s173 = sand.u32 %s41, 1
        %s174 = scalar_lea.sflag [#allocation4], %s173
        %s175 = sand.u32 %s41, 1
        %s176 = smul.addr %s175, 12
        %s177 = scalar_lea.vmem [#allocation3], %s176
        // Predicated region
        $region29: #{tpu_custom_call.1} parent=27 // pred_check
          %p178 = pneg %p54
        $region30: #{tpu_custom_call.1} parent=27 // pred_check_branch
          %180 = sbr.rel (%p178) target = $region32
        $region31: #{tpu_custom_call.1} parent=27 // pred_region
          %182 = dma.done %s174, 192
        $region32: #{tpu_custom_call.1} parent=27 // pred_fallthru
          _
        %s183 = sand.u32 %s67, 1
        %s184 = scalar_lea.sflag [#allocation6], %s183
        %s185 = sand.u32 %s67, 1
        %s186 = smul.addr %s185, 2
        %s187 = scalar_lea.vmem [#allocation5], %s186
        // Predicated region
        $region33: #{tpu_custom_call.1} parent=27 // pred_check
          %p188 = pneg %p80
        $region34: #{tpu_custom_call.1} parent=27 // pred_check_branch
          %190 = sbr.rel (%p188) target = $region36
        $region35: #{tpu_custom_call.1} parent=27 // pred_region
          %192 = dma.done %s184, 32
        $region36: #{tpu_custom_call.1} parent=27 // pred_fallthru
          _
        %s193 = sand.u32 %s41, 1
        %s194 = scalar_lea.sflag [#allocation4], %s193
        %s195 = sand.u32 %s41, 1
        %s196 = smul.addr %s195, 12
        %s197 = scalar_lea.vmem [#allocation3], %s196
        %p198 = pneg %p54
        %p199 = pneg %p51
        %s200 = sand.u32 %s67, 1
        %s201 = scalar_lea.sflag [#allocation6], %s200
        %s202 = sand.u32 %s67, 1
        %s203 = smul.addr %s202, 2
        %s204 = scalar_lea.vmem [#allocation5], %s203
        %p205 = pneg %p80
        %p206 = pneg %p77
        %p207 = pneg %p106
        %p208 = pneg %p103
        %p209 = scmp.lt.s32.totalorder %s23, 1
        %s210 = scalar_select %p209, %s23, 1
        %s211 = scalar_lea.vmem %s2, %s210
        %s212 = smul.u32 3, %s24
        %p213 = scmp.lt.s32.totalorder %s23, 1
        %s214 = scalar_select %p213, %s23, 1
        %s215 = scalar_lea.vmem %s2, %s214
        %p217 = scmp.eq.s32.totalorder %s24, 0
        // Predicated region
        $region37: #{tpu_custom_call.1} parent=27 // pred_check
          %p218 = pneg %p217
        $region38: #{tpu_custom_call.1} parent=27 // pred_check_branch
          %220 = sbr.rel (%p218) target = $region40
        $region39: #{tpu_custom_call.1} parent=27 // pred_region
          %vm221 = vcmask 64512
          %222 = vst.msk [vmem:[#allocation2] sm:$0xff] %vm221, 0.0
        $region40: #{tpu_custom_call.1} parent=27 // pred_fallthru
          _
        %v223 = vld [vmem:[%s177] sm:$0xff]
        %v224 = vld [vmem:[%s177 + $0x8] sm:$0xf]
        %v225 = vld [vmem:[#allocation2] sm:$0xff]
        %v228 = vunpack.c.l.b16 %v223
        %v229 = vunpack.c.h.b16 %v223
        %v230 = vunpack.c.l.b16 %v224
        %v231 = vpack.c.b16 %v228, %v228
        %v232 = vpack.c.b16 %v229, %v229
        %v233 = vpack.c.b16 %v230, %v230
        %237 = vmatpush.bf16.xpose.msra.mxu0 0
        %238 = vmatpush.bf16.xpose.msra.mxu0 0
        %239 = vmatpush.bf16.xpose.msra.mxu0 0
        %240 = vmatpush.bf16.xpose.msra.mxu0 0
        %241 = vmatpush.bf16.xpose.msra.mxu0 0
        %242 = vmatpush.bf16.xpose.msra.mxu0 0
        %243 = vmatpush.bf16.xpose.msra.mxu0 0
        %244 = vmatpush.bf16.xpose.msra.mxu0 %v231
        %245 = vmatmul.bf16.gmra.mxu0 %v231
        %v246 = vpop.f32.mrf.mxu0
        %v247 = vadd.f32 0.0, %v246
        %v248 = vpop.f32.mrf.mxu0
        %249 = vdwg.mxu0
        %250 = vmatpush.bf16.xpose.msra.mxu0 0
        %251 = vmatpush.bf16.xpose.msra.mxu0 0
        %252 = vmatpush.bf16.xpose.msra.mxu0 0
        %253 = vmatpush.bf16.xpose.msra.mxu0 0
        %254 = vmatpush.bf16.xpose.msra.mxu0 0
        %255 = vmatpush.bf16.xpose.msra.mxu0 0
        %256 = vmatpush.bf16.xpose.msra.mxu0 0
        %257 = vmatpush.bf16.xpose.msra.mxu0 %v232
        %258 = vmatmul.bf16.gmra.mxu0 %v232
        %v259 = vpop.f32.mrf.mxu0
        %v260 = vadd.f32 %v247, %v259
        %v261 = vpop.f32.mrf.mxu0
        %262 = vdwg.mxu0
        %263 = vmatpush.bf16.xpose.msra.mxu0 0
        %264 = vmatpush.bf16.xpose.msra.mxu0 0
        %265 = vmatpush.bf16.xpose.msra.mxu0 0
        %266 = vmatpush.bf16.xpose.msra.mxu0 0
        %267 = vmatpush.bf16.xpose.msra.mxu0 0
        %268 = vmatpush.bf16.xpose.msra.mxu0 0
        %269 = vmatpush.bf16.xpose.msra.mxu0 0
        %270 = vmatpush.bf16.xpose.msra.mxu0 %v233
        %271 = vmatmul.bf16.gmra.mxu0 %v233
        %v272 = vpop.f32.mrf.mxu0
        %v273 = vadd.f32 %v260, %v272
        %v274 = vpop.f32.mrf.mxu0
        %275 = vdwg.mxu0
        %v276 = vadd.f32 %v225, %v273
        %vm277 = vcmask 64512
        %278 = vst.msk [vmem:[#allocation2] sm:$0xff] %vm277, %v276
        %p279 = scmp.eq.s32.totalorder %s24, 2
        // Predicated region
        $region41: #{tpu_custom_call.1} parent=27 // pred_check
          %p280 = pneg %p279
        $region42: #{tpu_custom_call.1} parent=27 // pred_check_branch
          %282 = sbr.rel (%p280) target = $region44
        $region43: #{tpu_custom_call.1} parent=27 // pred_region
          %v283 = vld [vmem:[#allocation2] sm:$0xff]
          %v284 = vld [vmem:[%s187] sm:$0x3]
          %v286 = vsel %vm277, %v284, 0
          %288 = vmatpush.msra.mxu0 0.0
          %289 = vmatpush.msra.mxu0 0.0
          %290 = vmatpush.msra.mxu0 0.0
          %291 = vmatpush.msra.mxu0 0.0
          %292 = vmatpush.msra.mxu0 0.0
          %293 = vmatpush.msra.mxu0 0.0
          %294 = vmatpush.msra.mxu0 0.0
          %295 = vmatpush.msra.mxu0 0.0
          %296 = vmatpush.msra.mxu0 0.0
          %297 = vmatpush.msra.mxu0 0.0
          %298 = vmatpush.msra.mxu0 0.0
          %299 = vmatpush.msra.mxu0 0.0
          %300 = vmatpush.msra.mxu0 0.0
          %301 = vmatpush.msra.mxu0 0.0
          %302 = vmatpush.msra.mxu0 0.0
          %303 = vmatpush.msra.mxu0 %v283
          %304 = vmatmul.f32.gmra.mxu0 %v286
          %v305 = vpop.f32.mrf.mxu0
          %v306 = vadd.f32 0.0, %v305
          %307 = vdwg.mxu0
          %v309 = vsel %vm277, %v306, 0
          %311 = vmatpush.msra.mxu0 0.0
          %312 = vmatpush.msra.mxu0 0.0
          %313 = vmatpush.msra.mxu0 0.0
          %314 = vmatpush.msra.mxu0 0.0
          %315 = vmatpush.msra.mxu0 0.0
          %316 = vmatpush.msra.mxu0 0.0
          %317 = vmatpush.msra.mxu0 0.0
          %318 = vmatpush.msra.mxu0 0.0
          %319 = vmatpush.msra.mxu0 0.0
          %320 = vmatpush.msra.mxu0 0.0
          %321 = vmatpush.msra.mxu0 0.0
          %322 = vmatpush.msra.mxu0 0.0
          %323 = vmatpush.msra.mxu0 0.0
          %324 = vmatpush.msra.mxu0 0.0
          %325 = vmatpush.msra.mxu0 0.0
          %326 = vmatpush.msra.mxu0 %v283
          %327 = vmatmul.f32.gmra.mxu0 %v309
          %v328 = vpop.f32.mrf.mxu0
          %v329 = vadd.f32 0.0, %v328
          %330 = vdwg.mxu0
          %v331 = vmul.f32 %v329, %v306
          %vm332 = vcmask 57344
          %v333 = vsel %vm332, %v331, 0.0
          %334 = vadd.xlane.f32.xlu0 %v333
          %v335 = vpop.xlane.xlu0 %334
          %v336 = vrot.slane %v335, 4
          %v337 = vadd.f32 %v335, %v336
          %v338 = vrot.slane %v337, 2
          %v339 = vadd.f32 %v337, %v338
          %v340 = vrot.slane %v339, 1
          %v341 = vadd.f32 %v339, %v340
          %s342 = vtos %v341
          %v343 = vstv %s342
          %v344 = vmul.f32 %v306, %v306
          %v345 = vsel %vm332, %v344, 0.0
          %346 = vadd.xlane.f32.xlu0 %v345
          %v347 = vpop.xlane.xlu0 %346
          %v348 = vrot.slane %v347, 4
          %v349 = vadd.f32 %v347, %v348
          %v350 = vrot.slane %v349, 2
          %v351 = vadd.f32 %v349, %v350
          %v352 = vrot.slane %v351, 1
          %v353 = vadd.f32 %v351, %v352
          %s354 = vtos %v353
          %v355 = vstv %s354
          %v356 = vrcp.pop %v355
          %v357 = vmul.f32 %v355, %v356
          %v358 = vsub.f32 1.0, %v357
          %v359 = vmul.f32 %v356, %v358
          %v360 = vadd.f32 %v356, %v359
          %vm361 = vweird.f32 %v355
          %vm362 = vweird.f32 %v356
          %vm363 = vmor %vm361, %vm362
          %v364 = vsel %vm363, %v356, %v360
          %v365 = vand.u32 2147483647, %v355
          %vm366 = vcmp.eq.f32.partialorder %v365, 8.507059e+37
          %v367 = vand.u32 %v355, 2147483648
          %v368 = vor.u32 1.1754944e-38, %v367
          %v369 = vsel %vm366, %v368, %v364
          %v370 = vmul.f32 %v343, %v369
          %v371 = vmul.f32 %v370, %v284
          %v372 = vsub.f32 %v306, %v371
          %v373 = vmul.f32 %v370, 2.0
          %v374 = vmul.f32 %v373, %v306
          %v375 = vsub.f32 %v329, %v374
          %v376 = vmul.f32 %v370, %v370
          %v377 = vmul.f32 %v376, %v284
          %v378 = vadd.f32 %v375, %v377
          %v379 = vmul.f32 %v378, %v372
          %v381 = vrot.slane %v379, 1
          %v383 = vsel %vm332, %v381, 0.0
          %384 = vadd.xlane.f32.xlu0 %v383
          %v385 = vpop.xlane.xlu0 %384
          %v386 = vrot.slane %v385, 4
          %v387 = vadd.f32 %v385, %v386
          %v388 = vrot.slane %v387, 2
          %v389 = vadd.f32 %v387, %v388
          %v390 = vrot.slane %v389, 1
          %v391 = vadd.f32 %v389, %v390
          %s392 = vtos %v391
          %v393 = vstv %s392
          %v394 = vmul.f32 %v372, %v372
          %v396 = vrot.slane %v394, 1
          %v398 = vsel %vm332, %v396, 0.0
          %399 = vadd.xlane.f32.xlu0 %v398
          %v400 = vpop.xlane.xlu0 %399
          %v401 = vrot.slane %v400, 4
          %v402 = vadd.f32 %v400, %v401
          %v403 = vrot.slane %v402, 2
          %v404 = vadd.f32 %v402, %v403
          %v405 = vrot.slane %v404, 1
          %v406 = vadd.f32 %v404, %v405
          %s407 = vtos %v406
          %v408 = vstv %s407
          %v409 = vrcp.pop %v408
          %v410 = vmul.f32 %v408, %v409
          %v411 = vsub.f32 1.0, %v410
          %v412 = vmul.f32 %v409, %v411
          %v413 = vadd.f32 %v409, %v412
          %vm414 = vweird.f32 %v408
          %vm415 = vweird.f32 %v409
          %vm416 = vmor %vm414, %vm415
          %v417 = vsel %vm416, %v409, %v413
          %v418 = vand.u32 2147483647, %v408
          %vm419 = vcmp.eq.f32.partialorder %v418, 8.507059e+37
          %v420 = vand.u32 %v408, 2147483648
          %v421 = vor.u32 1.1754944e-38, %v420
          %v422 = vsel %vm419, %v421, %v417
          %v423 = vmul.f32 %v393, %v422
          %v424 = vadd.f32 %v423, %v370
          %v425 = vsub.f32 %v424, %v370
          %v426 = vmul.f32 %v425, %v425
          %v427 = vmul.f32 %v426, 1e-05
          %vm428 = vcmask 0
          %429 = vst.msk [vmem:[%s215] sm:$0x1] %vm428, %v427
        $region44: #{tpu_custom_call.1} parent=27 // pred_fallthru
          _
        %p430 = scmp.lt.s32.totalorder %s23, 1
        %s431 = scalar_select %p430, %s23, 1
        %s432 = scalar_lea.vmem %s2, %s431
        // Predicated region
        $region45: #{tpu_custom_call.1} parent=27 // pred_check
          %p433 = pneg %p103
        $region46: #{tpu_custom_call.1} parent=27 // pred_check_branch
          %435 = sbr.rel (%p433) target = $region48
        $region47: #{tpu_custom_call.1} parent=27 // pred_region
          _
        $region48: #{tpu_custom_call.1} parent=27 // pred_fallthru
          _
      $region28: #{tpu_custom_call.1} parent=5 // pred_fallthru
        _
      %p436 = scmp.le.s32.totalorder 2, %s14
      // Predicated region
      $region49: #{tpu_custom_call.1} parent=5 // pred_check
        %p437 = pneg %p436
      $region50: #{tpu_custom_call.1} parent=5 // pred_check_branch
        %439 = sbr.rel (%p437) target = $region52
      $region51: #{tpu_custom_call.1} parent=5 // pred_region
        %s440 = ssub.s32 %s14, 2
        // Predicated region
        $region53: #{tpu_custom_call.1} parent=51 // pred_check
          %p441 = pneg %p109
        $region54: #{tpu_custom_call.1} parent=51 // pred_check_branch
          %443 = sbr.rel (%p441) target = $region56
        $region55: #{tpu_custom_call.1} parent=51 // pred_region
          %p444 = scmp.lt.s32.totalorder %s25, 1
          %s445 = scalar_select %p444, %s25, 1
          %s446 = scalar_lea.vmem %s2, %s445
        $region56: #{tpu_custom_call.1} parent=51 // pred_fallthru
          _
      $region52: #{tpu_custom_call.1} parent=5 // pred_fallthru
        _
    $region6: #{tpu_custom_call.1} parent=1 // loop_footer
      %s18 = sadd.s32 1, %s14
    $region7: #{tpu_custom_call.1} parent=1 // loop_footer_branch
      %13 = sbr.rel target = $region3
    $region8: #{tpu_custom_call.1} parent=1 // loop_exit
      _
    %447 = vsyncpa [#allocation4], 1
    %s448 = scalar_lea.sflag [#allocation4], 1
    %449 = vsyncpa %s448, 1
    %450 = vsyncpa [#allocation6], 1
    %s451 = scalar_lea.sflag [#allocation6], 1
    %452 = vsyncpa %s451, 1

</llo_original>
